<compile_context>
chip_gen: v6e
topology: v6e:2x2x1
jax: 0.10.0
libtpu: 0.0.40
codegen_flags: <defaults>
</compile_context>

<pallas_src>
import functools

import jax
import jax.numpy as jnp
from jax.experimental import pallas as pl
from jax.experimental.pallas import tpu as pltpu


def _attention_gate_kernel(gx_ref, wgx_ref, bh_ref, wp_ref, bp_ref, mask_ref,
                           out_ref, hpad_ref, *, H, W, Cg):
    """Fused: h = relu(conv_gx(concat(g,x)) + b); psi = relu(conv_psi(h) + b);
    out = x * psi.   (BatchNorm folded into conv weights/biases.)"""
    Wp = W + 2                       # column-padded row width
    M = H * Wp                       # compute-grid size (lane axis)
    F_int = bh_ref.shape[0]
    Cx = out_ref.shape[0]

    # Flattened tap offsets of a 3x3 SAME conv in the padded layout.
    offsets = [dyi * Wp + dxi for dyi in range(3) for dxi in range(3)]

    # ---- fused W_g / W_x conv: single im2col matmul, K = 9*(Cg+Cx) ----------
    patches = jnp.concatenate(
        [gx_ref[:, pl.ds(o, M)] for o in offsets], axis=0)          # (9*Cin, M)
    h_pre = jnp.dot(wgx_ref[...], patches,
                    preferred_element_type=jnp.float32) + bh_ref[...]
    # Zero the two horizontal pad columns of the compute grid so hpad below is
    # an exact zero-padded h image (mask precomputed in the wrapper).
    h = jnp.maximum(h_pre, 0.0) * mask_ref[...]                     # (F_int, M)

    # ---- build zero-padded h for the psi conv: only the halo is memset ------
    halo = jnp.zeros((F_int, Wp + 1), jnp.float32)
    hpad_ref[:, pl.ds(0, Wp + 1)] = halo
    hpad_ref[:, pl.ds(Wp + 1 + M, Wp + 1)] = halo
    hpad_ref[:, pl.ds(Wp + 1, M)] = h

    # ---- psi conv (F_int -> 1) on the VPU: 9 shifted MACs + sublane reduce --
    wp_all = wp_ref[...]                                            # (F_int, 9)
    acc = jnp.zeros((F_int, M), jnp.float32)
    for t, o in enumerate(offsets):
        acc = acc + hpad_ref[:, pl.ds(o, M)] * wp_all[:, t:t + 1]
    psi = jnp.maximum(jnp.sum(acc, axis=0, keepdims=True) + bp_ref[...], 0.0)

    # ---- out = x * psi  (x = the center tap of the x-half of gx) ------------
    x_center = gx_ref[pl.ds(Cg, Cx), pl.ds(Wp + 1, M)]              # (Cx, M)
    out_ref[...] = (x_center * psi).astype(out_ref.dtype)


def attention_block_pallas(g_nchw, x_nchw, params, eps=1e-5):
    """Wrapper: NCHW in / NCHW out. BN folding, weight flattening and spatial
    zero-padding (layout glue only) happen in plain JAX."""
    N, Cg, H, W = g_nchw.shape
    Cx = x_nchw.shape[1]
    Wp = W + 2
    M = H * Wp
    S = M + 2 * (Wp + 1)             # == (H+2)*(W+2) + 2

    def fold(p):
        scale = p["gamma"] / jnp.sqrt(p["var"] + eps)               # (Cout,)
        wf = (p["w"] * scale).astype(jnp.float32)                   # (3,3,Cin,Cout)
        bf = ((p["b"] - p["mean"]) * scale + p["beta"]).astype(jnp.float32)
        return wf, bf

    wg, bg = fold(params["W_g"])
    wx, bx = fold(params["W_x"])
    wp, bp = fold(params["psi"])
    F_int = wg.shape[-1]
    Cin = Cg + Cx

    # Fused g/x conv weights -> (F_int, 9*(Cg+Cx)); biases add since h = g1+x1.
    # NOTE: cast w_flat / gx to bfloat16 here for v6e/v7x MXU rate if ~1e-2
    # accuracy is acceptable; kept f32 to match the strict reference check.
    w_gx = jnp.concatenate([wg, wx], axis=2)                        # (3,3,Cin,F_int)
    w_flat = jnp.transpose(w_gx.reshape(9, Cin, F_int), (2, 0, 1)).reshape(
        F_int, 9 * Cin)
    b_h = (bg + bx).reshape(F_int, 1)
    wp_t = jnp.transpose(wp.reshape(9, F_int))                      # (F_int, 9)
    bp_s = bp.reshape(1, 1)

    # channels-first, spatially zero-padded, flattened: (N, Cg+Cx, S)
    gx = jnp.concatenate([g_nchw, x_nchw], axis=1).astype(jnp.float32)
    gx = jnp.pad(gx, ((0, 0), (0, 0), (1, 1), (1, 1)))              # (N,Cin,H+2,W+2)
    gx = gx.reshape(N, Cin, (H + 2) * Wp)
    gx = jnp.pad(gx, ((0, 0), (0, 0), (1, 1)))                      # (N,Cin,S)

    # Horizontal-pad-column mask for h (built once, outside the kernel).
    col = (jnp.arange(M, dtype=jnp.int32) % Wp).reshape(1, M)
    col_mask = ((col != 0) & (col != Wp - 1)).astype(jnp.float32)   # (1, M)

    kernel = functools.partial(_attention_gate_kernel, H=H, W=W, Cg=Cg)

    out_cg = pl.pallas_call(
        kernel,
        out_shape=jax.ShapeDtypeStruct((N, Cx, M), x_nchw.dtype),
        grid_spec=pltpu.PrefetchScalarGridSpec(
            num_scalar_prefetch=0,
            grid=(N,),
            in_specs=[
                pl.BlockSpec((pl.Squeezed(), Cin, S), lambda n: (n, 0, 0)),
                pl.BlockSpec((F_int, 9 * Cin), lambda n: (0, 0)),
                pl.BlockSpec((F_int, 1), lambda n: (0, 0)),
                pl.BlockSpec((F_int, 9), lambda n: (0, 0)),
                pl.BlockSpec((1, 1), lambda n: (0, 0)),
                pl.BlockSpec((1, M), lambda n: (0, 0)),
            ],
            out_specs=pl.BlockSpec((pl.Squeezed(), Cx, M), lambda n: (n, 0, 0)),
            scratch_shapes=[pltpu.VMEM((F_int, S), jnp.float32)],
        ),
        compiler_params=pltpu.CompilerParams(dimension_semantics=("parallel",)),
    )(gx, w_flat, b_h, wp_t, bp_s, col_mask)

    # Drop the horizontal pad columns of the compute grid -> NCHW.
    return out_cg.reshape(N, Cx, H, Wp)[:, :, :, 1:W + 1]


def attention_block_reference(g_nchw, x_nchw, params, eps=1e-5):
    """Pure-JAX reference (eval-mode BN), NCHW in / NCHW out."""
    def conv_bn(a_nhwc, p):
        z = jax.lax.conv_general_dilated(
            a_nhwc, p["w"], window_strides=(1, 1), padding="SAME",
            dimension_numbers=("NHWC", "HWIO", "NHWC")) + p["b"]
        return p["gamma"] * (z - p["mean"]) * jax.lax.rsqrt(p["var"] + eps) + p["beta"]

    g = jnp.transpose(g_nchw, (0, 2, 3, 1))
    x = jnp.transpose(x_nchw, (0, 2, 3, 1))
    h = jax.nn.relu(conv_bn(g, params["W_g"]) + conv_bn(x, params["W_x"]))
    psi = jax.nn.relu(conv_bn(h, params["psi"]))
    return jnp.transpose(x * psi, (0, 3, 1, 2))


def make_params(key, F_g, F_l, F_int):
    ks = iter(jax.random.split(key, 18))

    def conv_bn_params(cin, cout):
        return {
            "w": 0.2 * jax.random.normal(next(ks), (3, 3, cin, cout), jnp.float32),
            "b": 0.1 * jax.random.normal(next(ks), (cout,), jnp.float32),
            "gamma": 1.0 + 0.1 * jax.random.normal(next(ks), (cout,), jnp.float32),
            "beta": 0.1 * jax.random.normal(next(ks), (cout,), jnp.float32),
            "mean": 0.1 * jax.random.normal(next(ks), (cout,), jnp.float32),
            "var": 0.5 + jax.nn.sigmoid(jax.random.normal(next(ks), (cout,), jnp.float32)),
        }

    return {"W_g": conv_bn_params(F_g, F_int),
            "W_x": conv_bn_params(F_l, F_int),
            "psi": conv_bn_params(F_int, 1)}


if __name__ == "__main__":
    key = jax.random.PRNGKey(0)
    k_g, k_x, k_p = jax.random.split(key, 3)

    N, F_g, F_l, F_int, H, W = 2, 4, 4, 8, 16, 16
    g = jax.random.normal(k_g, (N, F_g, H, W), jnp.float32)
    x = jax.random.normal(k_x, (N, F_l, H, W), jnp.float32)
    params = make_params(k_p, F_g, F_l, F_int)

    out = jax.block_until_ready(attention_block_pallas(g, x, params))
    ref = jax.block_until_ready(attention_block_reference(g, x, params))

    assert out.shape == (N, F_l, H, W), out.shape
    if not jnp.allclose(out, ref, atol=1e-4, rtol=1e-4):
        raise AssertionError(
            f"mismatch: max abs err = {float(jnp.max(jnp.abs(out - ref)))}")
    print("KERNEL_OK")
</pallas_src>

<mosaic_0001>
module attributes {stable_mosaic.version = 11 : i64} {
  func.func @_attention_gate_kernel(%arg0: i32, %arg1: memref<1x8x326xf32, #tpu.memory_space<vmem>>, %arg2: memref<8x72xf32, #tpu.memory_space<vmem>>, %arg3: memref<8x1xf32, #tpu.memory_space<vmem>>, %arg4: memref<8x9xf32, #tpu.memory_space<vmem>>, %arg5: memref<1x1xf32, #tpu.memory_space<vmem>>, %arg6: memref<1x288xf32, #tpu.memory_space<vmem>>, %arg7: memref<1x4x288xf32, #tpu.memory_space<vmem>>, %arg8: memref<8x326xf32, #tpu.memory_space<vmem>>) attributes {dimension_semantics = [#tpu.dimension_semantics<parallel>], iteration_bounds = array<i64: 2>, scalar_prefetch = 0 : i64, scratch_operands = 1 : i64, tpu.core_type = #tpu.core_type<tc>, window_params = [{transform_indices = @transform_0, window_bounds = array<i64: 1, 8, 326>}, {pipeline_mode = #tpu.pipeline_mode<synchronous>, transform_indices = @transform_1, window_bounds = array<i64: 8, 72>}, {pipeline_mode = #tpu.pipeline_mode<synchronous>, transform_indices = @transform_2, window_bounds = array<i64: 8, 1>}, {pipeline_mode = #tpu.pipeline_mode<synchronous>, transform_indices = @transform_3, window_bounds = array<i64: 8, 9>}, {pipeline_mode = #tpu.pipeline_mode<synchronous>, transform_indices = @transform_4, window_bounds = array<i64: 1, 1>}, {pipeline_mode = #tpu.pipeline_mode<synchronous>, transform_indices = @transform_5, window_bounds = array<i64: 1, 288>}, {transform_indices = @transform_6, window_bounds = array<i64: 1, 4, 288>}]} {
    %c0 = arith.constant 0 : index
    %c0_0 = arith.constant 0 : index
    %c0_1 = arith.constant 0 : index
    %0 = vector.load %arg1[%c0, %c0_0, %c0_1] : memref<1x8x326xf32, #tpu.memory_space<vmem>>, vector<1x8x288xf32>
    %1 = vector.shape_cast %0 : vector<1x8x288xf32> to vector<8x288xf32>
    %c0_2 = arith.constant 0 : index
    %c0_3 = arith.constant 0 : index
    %c1 = arith.constant 1 : index
    %2 = vector.load %arg1[%c0_2, %c0_3, %c1] : memref<1x8x326xf32, #tpu.memory_space<vmem>>, vector<1x8x288xf32>
    %3 = vector.shape_cast %2 : vector<1x8x288xf32> to vector<8x288xf32>
    %c0_4 = arith.constant 0 : index
    %c0_5 = arith.constant 0 : index
    %c2 = arith.constant 2 : index
    %4 = vector.load %arg1[%c0_4, %c0_5, %c2] : memref<1x8x326xf32, #tpu.memory_space<vmem>>, vector<1x8x288xf32>
    %5 = vector.shape_cast %4 : vector<1x8x288xf32> to vector<8x288xf32>
    %c0_6 = arith.constant 0 : index
    %c0_7 = arith.constant 0 : index
    %c18 = arith.constant 18 : index
    %6 = vector.load %arg1[%c0_6, %c0_7, %c18] : memref<1x8x326xf32, #tpu.memory_space<vmem>>, vector<1x8x288xf32>
    %7 = vector.shape_cast %6 : vector<1x8x288xf32> to vector<8x288xf32>
    %c0_8 = arith.constant 0 : index
    %c0_9 = arith.constant 0 : index
    %c19 = arith.constant 19 : index
    %8 = vector.load %arg1[%c0_8, %c0_9, %c19] : memref<1x8x326xf32, #tpu.memory_space<vmem>>, vector<1x8x288xf32>
    %9 = vector.shape_cast %8 : vector<1x8x288xf32> to vector<8x288xf32>
    %c0_10 = arith.constant 0 : index
    %c0_11 = arith.constant 0 : index
    %c20 = arith.constant 20 : index
    %10 = vector.load %arg1[%c0_10, %c0_11, %c20] : memref<1x8x326xf32, #tpu.memory_space<vmem>>, vector<1x8x288xf32>
    %11 = vector.shape_cast %10 : vector<1x8x288xf32> to vector<8x288xf32>
    %c0_12 = arith.constant 0 : index
    %c0_13 = arith.constant 0 : index
    %c36 = arith.constant 36 : index
    %12 = vector.load %arg1[%c0_12, %c0_13, %c36] : memref<1x8x326xf32, #tpu.memory_space<vmem>>, vector<1x8x288xf32>
    %13 = vector.shape_cast %12 : vector<1x8x288xf32> to vector<8x288xf32>
    %c0_14 = arith.constant 0 : index
    %c0_15 = arith.constant 0 : index
    %c37 = arith.constant 37 : index
    %14 = vector.load %arg1[%c0_14, %c0_15, %c37] : memref<1x8x326xf32, #tpu.memory_space<vmem>>, vector<1x8x288xf32>
    %15 = vector.shape_cast %14 : vector<1x8x288xf32> to vector<8x288xf32>
    %c0_16 = arith.constant 0 : index
    %c0_17 = arith.constant 0 : index
    %c38 = arith.constant 38 : index
    %16 = vector.load %arg1[%c0_16, %c0_17, %c38] : memref<1x8x326xf32, #tpu.memory_space<vmem>>, vector<1x8x288xf32>
    %17 = vector.shape_cast %16 : vector<1x8x288xf32> to vector<8x288xf32>
    %18 = tpu.concatenate %1, %3, %5, %7, %9, %11, %13, %15, %17 in 0 : vector<8x288xf32>, vector<8x288xf32>, vector<8x288xf32>, vector<8x288xf32>, vector<8x288xf32>, vector<8x288xf32>, vector<8x288xf32>, vector<8x288xf32>, vector<8x288xf32> -> vector<72x288xf32>
    %c0_18 = arith.constant 0 : index
    %c0_19 = arith.constant 0 : index
    %19 = vector.load %arg2[%c0_18, %c0_19] : memref<8x72xf32, #tpu.memory_space<vmem>>, vector<8x72xf32>
    %cst = arith.constant dense<0.000000e+00> : vector<8x288xf32>
    %20 = tpu.matmul %19, %18, %cst {dimension_numbers = #tpu.dot_dimension_numbers<[1], [0], [0], [1], [0, 0, 1, 1], [], []>} : vector<8x72xf32>, vector<72x288xf32>, vector<8x288xf32> -> vector<8x288xf32>
    %c0_20 = arith.constant 0 : index
    %c0_21 = arith.constant 0 : index
    %21 = vector.load %arg3[%c0_20, %c0_21] : memref<8x1xf32, #tpu.memory_space<vmem>>, vector<8x1xf32>
    %22 = vector.broadcast %21 : vector<8x1xf32> to vector<8x288xf32>
    %23 = arith.addf %20, %22 : vector<8x288xf32>
    %cst_22 = arith.constant 0.000000e+00 : f32
    %24 = vector.broadcast %cst_22 : f32 to vector<8x288xf32>
    %25 = arith.maximumf %23, %24 : vector<8x288xf32>
    %c0_23 = arith.constant 0 : index
    %c0_24 = arith.constant 0 : index
    %26 = vector.load %arg6[%c0_23, %c0_24] : memref<1x288xf32, #tpu.memory_space<vmem>>, vector<1x288xf32>
    %27 = vector.broadcast %26 : vector<1x288xf32> to vector<8x288xf32>
    %28 = arith.mulf %25, %27 : vector<8x288xf32>
    %cst_25 = arith.constant 0.000000e+00 : f32
    %29 = vector.broadcast %cst_25 : f32 to vector<8x19xf32>
    %c0_26 = arith.constant 0 : index
    %c0_27 = arith.constant 0 : index
    %30 = vector.load %arg8[%c0_26, %c0_27] : memref<8x326xf32, #tpu.memory_space<vmem>>, vector<8x19xf32>
    tpu.vector_store %arg8[%c0_26, %c0_27], %29 {strides = array<i32>} : memref<8x326xf32, #tpu.memory_space<vmem>>, vector<8x19xf32>,
    %c0_28 = arith.constant 0 : index
    %c307 = arith.constant 307 : index
    %31 = vector.load %arg8[%c0_28, %c307] : memref<8x326xf32, #tpu.memory_space<vmem>>, vector<8x19xf32>
    tpu.vector_store %arg8[%c0_28, %c307], %29 {strides = array<i32>} : memref<8x326xf32, #tpu.memory_space<vmem>>, vector<8x19xf32>,
    %c0_29 = arith.constant 0 : index
    %c19_30 = arith.constant 19 : index
    %32 = vector.load %arg8[%c0_29, %c19_30] : memref<8x326xf32, #tpu.memory_space<vmem>>, vector<8x288xf32>
    tpu.vector_store %arg8[%c0_29, %c19_30], %28 {strides = array<i32>} : memref<8x326xf32, #tpu.memory_space<vmem>>, vector<8x288xf32>,
    %c0_31 = arith.constant 0 : index
    %c0_32 = arith.constant 0 : index
    %33 = vector.load %arg4[%c0_31, %c0_32] : memref<8x9xf32, #tpu.memory_space<vmem>>, vector<8x9xf32>
    %cst_33 = arith.constant 0.000000e+00 : f32
    %34 = vector.broadcast %cst_33 : f32 to vector<8x288xf32>
    %c0_34 = arith.constant 0 : index
    %c0_35 = arith.constant 0 : index
    %35 = vector.load %arg8[%c0_34, %c0_35] : memref<8x326xf32, #tpu.memory_space<vmem>>, vector<8x288xf32>
    %36 = vector.extract_strided_slice %33 {offsets = [0, 0], sizes = [8, 1], strides = [1, 1]} : vector<8x9xf32> to vector<8x1xf32>
    %37 = vector.broadcast %36 : vector<8x1xf32> to vector<8x288xf32>
    %38 = arith.mulf %35, %37 : vector<8x288xf32>
    %39 = arith.addf %34, %38 : vector<8x288xf32>
    %c0_36 = arith.constant 0 : index
    %c1_37 = arith.constant 1 : index
    %40 = vector.load %arg8[%c0_36, %c1_37] : memref<8x326xf32, #tpu.memory_space<vmem>>, vector<8x288xf32>
    %41 = vector.extract_strided_slice %33 {offsets = [0, 1], sizes = [8, 1], strides = [1, 1]} : vector<8x9xf32> to vector<8x1xf32>
    %42 = vector.broadcast %41 : vector<8x1xf32> to vector<8x288xf32>
    %43 = arith.mulf %40, %42 : vector<8x288xf32>
    %44 = arith.addf %39, %43 : vector<8x288xf32>
    %c0_38 = arith.constant 0 : index
    %c2_39 = arith.constant 2 : index
    %45 = vector.load %arg8[%c0_38, %c2_39] : memref<8x326xf32, #tpu.memory_space<vmem>>, vector<8x288xf32>
    %46 = vector.extract_strided_slice %33 {offsets = [0, 2], sizes = [8, 1], strides = [1, 1]} : vector<8x9xf32> to vector<8x1xf32>
    %47 = vector.broadcast %46 : vector<8x1xf32> to vector<8x288xf32>
    %48 = arith.mulf %45, %47 : vector<8x288xf32>
    %49 = arith.addf %44, %48 : vector<8x288xf32>
    %c0_40 = arith.constant 0 : index
    %c18_41 = arith.constant 18 : index
    %50 = vector.load %arg8[%c0_40, %c18_41] : memref<8x326xf32, #tpu.memory_space<vmem>>, vector<8x288xf32>
    %51 = vector.extract_strided_slice %33 {offsets = [0, 3], sizes = [8, 1], strides = [1, 1]} : vector<8x9xf32> to vector<8x1xf32>
    %52 = vector.broadcast %51 : vector<8x1xf32> to vector<8x288xf32>
    %53 = arith.mulf %50, %52 : vector<8x288xf32>
    %54 = arith.addf %49, %53 : vector<8x288xf32>
    %c0_42 = arith.constant 0 : index
    %c19_43 = arith.constant 19 : index
    %55 = vector.load %arg8[%c0_42, %c19_43] : memref<8x326xf32, #tpu.memory_space<vmem>>, vector<8x288xf32>
    %56 = vector.extract_strided_slice %33 {offsets = [0, 4], sizes = [8, 1], strides = [1, 1]} : vector<8x9xf32> to vector<8x1xf32>
    %57 = vector.broadcast %56 : vector<8x1xf32> to vector<8x288xf32>
    %58 = arith.mulf %55, %57 : vector<8x288xf32>
    %59 = arith.addf %54, %58 : vector<8x288xf32>
    %c0_44 = arith.constant 0 : index
    %c20_45 = arith.constant 20 : index
    %60 = vector.load %arg8[%c0_44, %c20_45] : memref<8x326xf32, #tpu.memory_space<vmem>>, vector<8x288xf32>
    %61 = vector.extract_strided_slice %33 {offsets = [0, 5], sizes = [8, 1], strides = [1, 1]} : vector<8x9xf32> to vector<8x1xf32>
    %62 = vector.broadcast %61 : vector<8x1xf32> to vector<8x288xf32>
    %63 = arith.mulf %60, %62 : vector<8x288xf32>
    %64 = arith.addf %59, %63 : vector<8x288xf32>
    %c0_46 = arith.constant 0 : index
    %c36_47 = arith.constant 36 : index
    %65 = vector.load %arg8[%c0_46, %c36_47] : memref<8x326xf32, #tpu.memory_space<vmem>>, vector<8x288xf32>
    %66 = vector.extract_strided_slice %33 {offsets = [0, 6], sizes = [8, 1], strides = [1, 1]} : vector<8x9xf32> to vector<8x1xf32>
    %67 = vector.broadcast %66 : vector<8x1xf32> to vector<8x288xf32>
    %68 = arith.mulf %65, %67 : vector<8x288xf32>
    %69 = arith.addf %64, %68 : vector<8x288xf32>
    %c0_48 = arith.constant 0 : index
    %c37_49 = arith.constant 37 : index
    %70 = vector.load %arg8[%c0_48, %c37_49] : memref<8x326xf32, #tpu.memory_space<vmem>>, vector<8x288xf32>
    %71 = vector.extract_strided_slice %33 {offsets = [0, 7], sizes = [8, 1], strides = [1, 1]} : vector<8x9xf32> to vector<8x1xf32>
    %72 = vector.broadcast %71 : vector<8x1xf32> to vector<8x288xf32>
    %73 = arith.mulf %70, %72 : vector<8x288xf32>
    %74 = arith.addf %69, %73 : vector<8x288xf32>
    %c0_50 = arith.constant 0 : index
    %c38_51 = arith.constant 38 : index
    %75 = vector.load %arg8[%c0_50, %c38_51] : memref<8x326xf32, #tpu.memory_space<vmem>>, vector<8x288xf32>
    %76 = vector.extract_strided_slice %33 {offsets = [0, 8], sizes = [8, 1], strides = [1, 1]} : vector<8x9xf32> to vector<8x1xf32>
    %77 = vector.broadcast %76 : vector<8x1xf32> to vector<8x288xf32>
    %78 = arith.mulf %75, %77 : vector<8x288xf32>
    %79 = arith.addf %74, %78 : vector<8x288xf32>
    %cst_52 = arith.constant dense<0.000000e+00> : vector<288xf32>
    %80 = vector.multi_reduction <add>, %79, %cst_52 [0] : vector<8x288xf32> to vector<288xf32>
    %81 = vector.shape_cast %80 : vector<288xf32> to vector<1x288xf32>
    %c0_53 = arith.constant 0 : index
    %c0_54 = arith.constant 0 : index
    %82 = vector.load %arg5[%c0_53, %c0_54] : memref<1x1xf32, #tpu.memory_space<vmem>>, vector<1x1xf32>
    %83 = vector.broadcast %82 : vector<1x1xf32> to vector<1x288xf32>
    %84 = arith.addf %81, %83 : vector<1x288xf32>
    %cst_55 = arith.constant 0.000000e+00 : f32
    %85 = vector.broadcast %cst_55 : f32 to vector<1x288xf32>
    %86 = arith.maximumf %84, %85 : vector<1x288xf32>
    %c0_56 = arith.constant 0 : index
    %c4 = arith.constant 4 : index
    %c19_57 = arith.constant 19 : index
    %87 = vector.load %arg1[%c0_56, %c4, %c19_57] : memref<1x8x326xf32, #tpu.memory_space<vmem>>, vector<1x4x288xf32>
    %88 = vector.shape_cast %87 : vector<1x4x288xf32> to vector<4x288xf32>
    %89 = vector.broadcast %86 : vector<1x288xf32> to vector<4x288xf32>
    %90 = arith.mulf %88, %89 : vector<4x288xf32>
    %c0_58 = arith.constant 0 : index
    %c0_59 = arith.constant 0 : index
    %c0_60 = arith.constant 0 : index
    %91 = vector.load %arg7[%c0_58, %c0_59, %c0_60] : memref<1x4x288xf32, #tpu.memory_space<vmem>>, vector<1x4x288xf32>
    %92 = vector.shape_cast %91 : vector<1x4x288xf32> to vector<4x288xf32>
    %93 = vector.shape_cast %90 : vector<4x288xf32> to vector<1x4x288xf32>
    tpu.vector_store %arg7[%c0_58, %c0_59, %c0_60], %93 {strides = array<i32>} : memref<1x4x288xf32, #tpu.memory_space<vmem>>, vector<1x4x288xf32>,
    return
  }
  func.func @transform_0(%arg0: i32) -> (i32, i32, i32) {
    %c0_i32 = arith.constant 0 : i32
    %c0_i32_0 = arith.constant 0 : i32
    %c0_i32_1 = arith.constant 0 : i32
    return %arg0, %c0_i32, %c0_i32_0 : i32, i32, i32
  }
  func.func @transform_1(%arg0: i32) -> (i32, i32) {
    %c0_i32 = arith.constant 0 : i32
    %c0_i32_0 = arith.constant 0 : i32
    %c0_i32_1 = arith.constant 0 : i32
    return %c0_i32, %c0_i32_0 : i32, i32
  }
  func.func @transform_2(%arg0: i32) -> (i32, i32) {
    %c0_i32 = arith.constant 0 : i32
    %c0_i32_0 = arith.constant 0 : i32
    %c0_i32_1 = arith.constant 0 : i32
    return %c0_i32, %c0_i32_0 : i32, i32
  }
  func.func @transform_3(%arg0: i32) -> (i32, i32) {
    %c0_i32 = arith.constant 0 : i32
    %c0_i32_0 = arith.constant 0 : i32
    %c0_i32_1 = arith.constant 0 : i32
    return %c0_i32, %c0_i32_0 : i32, i32
  }
  func.func @transform_4(%arg0: i32) -> (i32, i32) {
    %c0_i32 = arith.constant 0 : i32
    %c0_i32_0 = arith.constant 0 : i32
    %c0_i32_1 = arith.constant 0 : i32
    return %c0_i32, %c0_i32_0 : i32, i32
  }
  func.func @transform_5(%arg0: i32) -> (i32, i32) {
    %c0_i32 = arith.constant 0 : i32
    %c0_i32_0 = arith.constant 0 : i32
    %c0_i32_1 = arith.constant 0 : i32
    return %c0_i32, %c0_i32_0 : i32, i32
  }
  func.func @transform_6(%arg0: i32) -> (i32, i32, i32) {
    %c0_i32 = arith.constant 0 : i32
    %c0_i32_0 = arith.constant 0 : i32
    %c0_i32_1 = arith.constant 0 : i32
    return %arg0, %c0_i32, %c0_i32_0 : i32, i32, i32
  }
}

</mosaic_0001>

<llo_original>
// kernel: tpu_custom_call.1
$region0: #{tpu_custom_call.1}
  #allocation0 [shape = 'u32[]', space=smem, size = 0x4, offset = 0x4, fixed_abs, tag = 'smem constant byte address 0x4 - core index']
  #allocation1 [shape = 'u32[144,128]{1,0:T(1,128)}', space=vmem, size = 0x12000, scoped, tag = 'internal scratch']
  #allocation2 [shape = 'f32[8,326]{1,0:T(8,128)}', space=vmem, size = 0x3000, scoped, tag = 'scratch operand']
  #allocation3 [shape = 'f32[1,1]{1,0:T(1,128)S(1)}', space=vmem, size = 0x200, scoped, tag = 'scoped memory for tpu_custom_call.1']
  %s0 = inlined_call_operand.hbm [shape: f32[2,8,326], index: 0, kind: input, shape index: {}]
  %s1 = inlined_call_operand.vmem [shape: f32[8,72], index: 1, kind: input, shape index: {}]
  %s2 = inlined_call_operand.vmem [shape: f32[8,1], index: 2, kind: input, shape index: {}]
  %s3 = inlined_call_operand.vmem [shape: f32[8,9], index: 3, kind: input, shape index: {}]
  %s4 = inlined_call_operand.<no memory space> [shape: f32[1,1], index: 4, kind: input, shape index: {}]
  %s5 = inlined_call_operand.hbm [shape: f32[1,288], index: 5, kind: input, shape index: {}]
  %s6 = inlined_call_operand.hbm [shape: f32[2,4,288], index: 6, kind: output, shape index: {}]
  %s7 = sld [smem:[#allocation0]]
  $region65: #{tpu_custom_call.1} parent=0
    _
  %s9 = ssub.s32 1, %s7
  %s10 = scalar_select 0, %s9, %s7
  %v11 = vstv %s4
  %12 = vst [vmem:[#allocation3] sm:$0x1] %v11
  $region1: #{tpu_custom_call.1} parent=0
    #allocation4 [shape = 'u8[24576]{0}', space=vmem, size = 0x6000, scoped, tag = 'input window, operand 0']
    #allocation5 [shape = 's32[2]{0}', space=sflag, size = 0x8, scoped, tag = 'scoped memory for tpu_custom_call.1']
    #allocation6 [shape = 's32[2]{0}', space=sflag, size = 0x8, scoped, tag = 'scoped memory for tpu_custom_call.1']
    #allocation7 [shape = 'u8[1536]{0}', space=vmem, size = 0x800, scoped, tag = 'input window, operand 5, single buffered']
    #allocation8 [shape = 's32[1]{0}', space=sflag, size = 0x4, scoped, tag = 'scoped memory for tpu_custom_call.1']
    #allocation9 [shape = 'u8[12288]{0}', space=vmem, size = 0x3000, scoped, tag = 'output window, operand 0']
    %13 = vsyncpa [#allocation5], 0
    %s14 = scalar_lea.sflag [#allocation5], 1
    %15 = vsyncpa %s14, 0
    %16 = vsyncpa [#allocation8], 0
    %17 = vsyncpa [#allocation6], 0
    %s18 = scalar_lea.sflag [#allocation6], 1
    %19 = vsyncpa %s18, 0
    loop: start=0, step=1, limit=4
    $region2: #{tpu_custom_call.1} parent=1 // loop_pre_header
      _
    $region3: #{tpu_custom_call.1} parent=1 // loop_header
      %s21 = sphi 0, %s25
      %p22 = scmp.ge.s32.totalorder %s21, 4
      %s31 = sphi 0, %s33
      %s34 = sphi 0, %s31
      %s35 = sphi 0, %s34
      %s51 = sphi 0, %s35
      %s55 = sphi 0, %s55
      %s57 = sphi 0, %s55
      %s58 = sphi 0, %s57
      %s72 = sphi 0, %s58
      %s76 = sphi 0, %s76
      %s78 = sphi 0, %s76
      %s79 = sphi 0, %s78
      %s93 = sphi 0, %s79
      %s97 = sphi 0, %s97
      %s99 = sphi 0, %s97
      %s100 = sphi 0, %s99
      %s114 = sphi 0, %s100
      %s118 = sphi 0, %s118
      %s120 = sphi 0, %s118
      %s121 = sphi 0, %s120
      %s135 = sphi 0, %s121
      %s139 = sphi 0, %s139
      %s141 = sphi 0, %s139
      %s142 = sphi 0, %s141
      %s156 = sphi 0, %s142
      %s162 = sphi 0, %s164
      %s165 = sphi 0, %s162
      %s166 = sphi 0, %s165
      %s182 = sphi 0, %s166
    $region4: #{tpu_custom_call.1} parent=1 // loop_header_branch
      %24 = sbr.rel (%p22) target = $region8
    $region5: #{tpu_custom_call.1} parent=1 // loop_body
      %s26 = ssub.s32 %s21, 1
      %s27 = ssub.s32 %s21, 2
      %s28 = sadd.s32 %s21, 1
      %s29 = ssub.s32 %s21, %s28
      %p30 = scmp.eq.s32.totalorder %s29, 0
      %s32 = sadd.s32 %s31, 1
      %s33 = scalar_select %p30, %s31, %s32
      %p36 = pneg %p30
      %p37 = scmp.eq.s32.totalorder %s21, 1
      %p38 = por %p36, %p37
      %p39 = scmp.ne.s32.totalorder %s31, %s34
      %p40 = scmp.eq.s32.totalorder %s21, 0
      %p41 = por %p39, %p40
      %p42 = scmp.ne.s32.totalorder %s31, %s34
      %p43 = scmp.eq.s32.totalorder %s26, 1
      %p44 = por %p42, %p43
      %p45 = scmp.ne.s32.totalorder %s34, %s35
      %p46 = scmp.eq.s32.totalorder %s26, 0
      %p47 = por %p45, %p46
      %p48 = scmp.ne.s32.totalorder %s34, %s35
      %p49 = scmp.eq.s32.totalorder %s27, 1
      %p50 = por %p48, %p49
      %p52 = scmp.ne.s32.totalorder %s35, %s51
      %p53 = scmp.eq.s32.totalorder %s27, 0
      %p54 = por %p52, %p53
      %s56 = sadd.s32 %s55, 1
      %p59 = scmp.eq.s32.totalorder %s21, 1
      %p60 = scmp.ne.s32.totalorder %s55, %s57
      %p61 = scmp.eq.s32.totalorder %s21, 0
      %p62 = por %p60, %p61
      %p63 = scmp.ne.s32.totalorder %s55, %s57
      %p64 = scmp.eq.s32.totalorder %s26, 1
      %p65 = por %p63, %p64
      %p66 = scmp.ne.s32.totalorder %s57, %s58
      %p67 = scmp.eq.s32.totalorder %s26, 0
      %p68 = por %p66, %p67
      %p69 = scmp.ne.s32.totalorder %s57, %s58
      %p70 = scmp.eq.s32.totalorder %s27, 1
      %p71 = por %p69, %p70
      %p73 = scmp.ne.s32.totalorder %s58, %s72
      %p74 = scmp.eq.s32.totalorder %s27, 0
      %p75 = por %p73, %p74
      %s77 = sadd.s32 %s76, 1
      %p80 = scmp.eq.s32.totalorder %s21, 1
      %p81 = scmp.ne.s32.totalorder %s76, %s78
      %p82 = scmp.eq.s32.totalorder %s21, 0
      %p83 = por %p81, %p82
      %p84 = scmp.ne.s32.totalorder %s76, %s78
      %p85 = scmp.eq.s32.totalorder %s26, 1
      %p86 = por %p84, %p85
      %p87 = scmp.ne.s32.totalorder %s78, %s79
      %p88 = scmp.eq.s32.totalorder %s26, 0
      %p89 = por %p87, %p88
      %p90 = scmp.ne.s32.totalorder %s78, %s79
      %p91 = scmp.eq.s32.totalorder %s27, 1
      %p92 = por %p90, %p91
      %p94 = scmp.ne.s32.totalorder %s79, %s93
      %p95 = scmp.eq.s32.totalorder %s27, 0
      %p96 = por %p94, %p95
      %s98 = sadd.s32 %s97, 1
      %p101 = scmp.eq.s32.totalorder %s21, 1
      %p102 = scmp.ne.s32.totalorder %s97, %s99
      %p103 = scmp.eq.s32.totalorder %s21, 0
      %p104 = por %p102, %p103
      %p105 = scmp.ne.s32.totalorder %s97, %s99
      %p106 = scmp.eq.s32.totalorder %s26, 1
      %p107 = por %p105, %p106
      %p108 = scmp.ne.s32.totalorder %s99, %s100
      %p109 = scmp.eq.s32.totalorder %s26, 0
      %p110 = por %p108, %p109
      %p111 = scmp.ne.s32.totalorder %s99, %s100
      %p112 = scmp.eq.s32.totalorder %s27, 1
      %p113 = por %p111, %p112
      %p115 = scmp.ne.s32.totalorder %s100, %s114
      %p116 = scmp.eq.s32.totalorder %s27, 0
      %p117 = por %p115, %p116
      %s119 = sadd.s32 %s118, 1
      %p122 = scmp.eq.s32.totalorder %s21, 1
      %p123 = scmp.ne.s32.totalorder %s118, %s120
      %p124 = scmp.eq.s32.totalorder %s21, 0
      %p125 = por %p123, %p124
      %p126 = scmp.ne.s32.totalorder %s118, %s120
      %p127 = scmp.eq.s32.totalorder %s26, 1
      %p128 = por %p126, %p127
      %p129 = scmp.ne.s32.totalorder %s120, %s121
      %p130 = scmp.eq.s32.totalorder %s26, 0
      %p131 = por %p129, %p130
      %p132 = scmp.ne.s32.totalorder %s120, %s121
      %p133 = scmp.eq.s32.totalorder %s27, 1
      %p134 = por %p132, %p133
      %p136 = scmp.ne.s32.totalorder %s121, %s135
      %p137 = scmp.eq.s32.totalorder %s27, 0
      %p138 = por %p136, %p137
      %s140 = sadd.s32 %s139, 1
      %p143 = scmp.eq.s32.totalorder %s21, 1
      %p144 = scmp.ne.s32.totalorder %s139, %s141
      %p145 = scmp.eq.s32.totalorder %s21, 0
      %p146 = por %p144, %p145
      %p147 = scmp.ne.s32.totalorder %s139, %s141
      %p148 = scmp.eq.s32.totalorder %s26, 1
      %p149 = por %p147, %p148
      %p150 = scmp.ne.s32.totalorder %s141, %s142
      %p151 = scmp.eq.s32.totalorder %s26, 0
      %p152 = por %p150, %p151
      %p153 = scmp.ne.s32.totalorder %s141, %s142
      %p154 = scmp.eq.s32.totalorder %s27, 1
      %p155 = por %p153, %p154
      %p157 = scmp.ne.s32.totalorder %s142, %s156
      %p158 = scmp.eq.s32.totalorder %s27, 0
      %p159 = por %p157, %p158
      %s160 = ssub.s32 %s21, %s28
      %p161 = scmp.eq.s32.totalorder %s160, 0
      %s163 = sadd.s32 %s162, 1
      %s164 = scalar_select %p161, %s162, %s163
      %p167 = pneg %p161
      %p168 = scmp.eq.s32.totalorder %s21, 1
      %p169 = por %p167, %p168
      %p170 = scmp.ne.s32.totalorder %s162, %s165
      %p171 = scmp.eq.s32.totalorder %s21, 0
      %p172 = por %p170, %p171
      %p173 = scmp.ne.s32.totalorder %s162, %s165
      %p174 = scmp.eq.s32.totalorder %s26, 1
      %p175 = por %p173, %p174
      %p176 = scmp.ne.s32.totalorder %s165, %s166
      %p177 = scmp.eq.s32.totalorder %s26, 0
      %p178 = por %p176, %p177
      %p179 = scmp.ne.s32.totalorder %s165, %s166
      %p180 = scmp.eq.s32.totalorder %s27, 1
      %p181 = por %p179, %p180
      %p183 = scmp.ne.s32.totalorder %s166, %s182
      %p184 = scmp.eq.s32.totalorder %s27, 0
      %p185 = por %p183, %p184
      %p186 = scmp.le.s32.totalorder 1, %s21
      %p187 = scmp.lt.s32.totalorder %s21, 3
      %p188 = pnand %p186, %p187
      %p189 = pneg %p188
      // Predicated region
      $region9: #{tpu_custom_call.1} parent=5 // pred_check
        _
      $region10: #{tpu_custom_call.1} parent=5 // pred_check_branch
        %191 = sbr.rel (%p188) target = $region12
      $region11: #{tpu_custom_call.1} parent=5 // pred_region
        %s192 = ssub.s32 %s21, 1
        // Predicated region
        $region13: #{tpu_custom_call.1} parent=11 // pred_check
          %p193 = pneg %p68
        $region14: #{tpu_custom_call.1} parent=11 // pred_check_branch
          %195 = sbr.rel (%p193) target = $region16
        $region15: #{tpu_custom_call.1} parent=11 // pred_region
          _
        $region16: #{tpu_custom_call.1} parent=11 // pred_fallthru
          _
        // Predicated region
        $region17: #{tpu_custom_call.1} parent=11 // pred_check
          %p196 = pneg %p89
        $region18: #{tpu_custom_call.1} parent=11 // pred_check_branch
          %198 = sbr.rel (%p196) target = $region20
        $region19: #{tpu_custom_call.1} parent=11 // pred_region
          _
        $region20: #{tpu_custom_call.1} parent=11 // pred_fallthru
          _
        // Predicated region
        $region21: #{tpu_custom_call.1} parent=11 // pred_check
          %p199 = pneg %p110
        $region22: #{tpu_custom_call.1} parent=11 // pred_check_branch
          %201 = sbr.rel (%p199) target = $region24
        $region23: #{tpu_custom_call.1} parent=11 // pred_region
          _
        $region24: #{tpu_custom_call.1} parent=11 // pred_fallthru
          _
        // Predicated region
        $region25: #{tpu_custom_call.1} parent=11 // pred_check
          %p202 = pneg %p131
        $region26: #{tpu_custom_call.1} parent=11 // pred_check_branch
          %204 = sbr.rel (%p202) target = $region28
        $region27: #{tpu_custom_call.1} parent=11 // pred_region
          _
        $region28: #{tpu_custom_call.1} parent=11 // pred_fallthru
          _
        // Predicated region
        $region29: #{tpu_custom_call.1} parent=11 // pred_check
          %p205 = pneg %p152
        $region30: #{tpu_custom_call.1} parent=11 // pred_check_branch
          %207 = sbr.rel (%p205) target = $region32
        $region31: #{tpu_custom_call.1} parent=11 // pred_region
          %s209 = ssub.s32 48, 48
          %210 = vsyncadd [#allocation8], %s209
          %s212 = sshll.u32 [#allocation7], 4
          %s213 = int_to_ptr.vmem [resolvable:$true] %s212
          %215 = dma.hbm_to_vmem [thread:$0]  %s5, 48, %s213, [#allocation8]
        $region32: #{tpu_custom_call.1} parent=11 // pred_fallthru
          _
      $region12: #{tpu_custom_call.1} parent=5 // pred_fallthru
        _
      %p216 = scmp.lt.s32.totalorder %s21, 2
      // Predicated region
      $region33: #{tpu_custom_call.1} parent=5 // pred_check
        %p217 = pneg %p216
      $region34: #{tpu_custom_call.1} parent=5 // pred_check_branch
        %219 = sbr.rel (%p217) target = $region36
      $region35: #{tpu_custom_call.1} parent=5 // pred_region
        // Predicated region
        $region37: #{tpu_custom_call.1} parent=35 // pred_check
          %p220 = pneg %p41
        $region38: #{tpu_custom_call.1} parent=35 // pred_check_branch
          %222 = sbr.rel (%p220) target = $region40
        $region39: #{tpu_custom_call.1} parent=35 // pred_region
          %s223 = sand.u32 %s31, 1
          %s224 = scalar_lea.sflag [#allocation5], %s223
          %s225 = sand.u32 %s31, 1
          %s226 = smul.addr %s225, 24
          %s227 = scalar_lea.vmem [#allocation4], %s226
          %s229 = ssub.s32 384, 384
          %230 = vsyncadd %s224, %s229
          %s231 = smul.addr %s21, 3
          %s232 = smul.addr %s231, 128
          %s233 = scalar_lea.hbm %s0, %s232
          %s235 = sshll.u32 %s227, 4
          %s236 = int_to_ptr.vmem [resolvable:$true] %s235
          %238 = dma.hbm_to_vmem [thread:$0]  %s233, 384, %s236, %s224
        $region40: #{tpu_custom_call.1} parent=35 // pred_fallthru
          _
      $region36: #{tpu_custom_call.1} parent=5 // pred_fallthru
        _
      %p239 = scmp.le.s32.totalorder 1, %s21
      %p240 = scmp.lt.s32.totalorder %s21, 3
      %p241 = pnand %p239, %p240
      %p242 = pneg %p241
      // Predicated region
      $region41: #{tpu_custom_call.1} parent=5 // pred_check
        _
      $region42: #{tpu_custom_call.1} parent=5 // pred_check_branch
        %244 = sbr.rel (%p241) target = $region44
      $region43: #{tpu_custom_call.1} parent=5 // pred_region
        %s245 = ssub.s32 %s21, 1
        %s246 = sand.u32 %s34, 1
        %s247 = scalar_lea.sflag [#allocation5], %s246
        %s248 = sand.u32 %s34, 1
        %s249 = smul.addr %s248, 24
        %s250 = scalar_lea.vmem [#allocation4], %s249
        // Predicated region
        $region45: #{tpu_custom_call.1} parent=43 // pred_check
          %p251 = pneg %p47
        $region46: #{tpu_custom_call.1} parent=43 // pred_check_branch
          %253 = sbr.rel (%p251) target = $region48
        $region47: #{tpu_custom_call.1} parent=43 // pred_region
          %254 = dma.done %s247, 384
        $region48: #{tpu_custom_call.1} parent=43 // pred_fallthru
          _
        // Predicated region
        $region49: #{tpu_custom_call.1} parent=43 // pred_check
          %p255 = pneg %p152
        $region50: #{tpu_custom_call.1} parent=43 // pred_check_branch
          %257 = sbr.rel (%p255) target = $region52
        $region51: #{tpu_custom_call.1} parent=43 // pred_region
          %258 = dma.done [#allocation8], 48
        $region52: #{tpu_custom_call.1} parent=43 // pred_fallthru
          _
        %s259 = sand.u32 %s34, 1
        %s260 = scalar_lea.sflag [#allocation5], %s259
        %s261 = sand.u32 %s34, 1
        %s262 = smul.addr %s261, 24
        %s263 = scalar_lea.vmem [#allocation4], %s262
        %p264 = pneg %p47
        %p265 = pneg %p44
        %p266 = pneg %p68
        %p267 = pneg %p65
        %p268 = pneg %p89
        %p269 = pneg %p86
        %p270 = pneg %p110
        %p271 = pneg %p107
        %p272 = pneg %p131
        %p273 = pneg %p128
        %p274 = pneg %p152
        %p275 = pneg %p149
        %p276 = pneg %p178
        %p277 = pneg %p175
        %s278 = sand.u32 %s165, 1
        %s279 = scalar_lea.sflag [#allocation6], %s278
        %s280 = sand.u32 %s165, 1
        %s281 = smul.addr %s280, 12
        %s282 = scalar_lea.vmem [#allocation9], %s281
        %v283 = vld [vmem:[%s250] sm:$0xff]
        %v284 = vld [vmem:[%s250 + $0x8] sm:$0xff]
        %v285 = vld [vmem:[%s250 + $0x10] sm:$0xff]
        %289 = vrot.lane.b32.xlu0 %v283, 127
        %v290 = vpop.permute.xlu0 %289
        %291 = vrot.lane.b32.xlu0 %v284, 127
        %v292 = vpop.permute.xlu0 %291
        %293 = vrot.lane.b32.xlu0 %v285, 127
        %v294 = vpop.permute.xlu0 %293
        %vm295 = vcmask 1039360
        %v296 = vsel %vm295, %v290, %v292
        %v297 = vsel %vm295, %v292, %v294
        %301 = vrot.lane.b32.xlu0 %v283, 126
        %v302 = vpop.permute.xlu0 %301
        %303 = vrot.lane.b32.xlu0 %v284, 126
        %v304 = vpop.permute.xlu0 %303
        %305 = vrot.lane.b32.xlu0 %v285, 126
        %v306 = vpop.permute.xlu0 %305
        %vm307 = vcmask 1031168
        %v308 = vsel %vm307, %v302, %v304
        %v309 = vsel %vm307, %v304, %v306
        %313 = vrot.lane.b32.xlu0 %v283, 110
        %v314 = vpop.permute.xlu0 %313
        %315 = vrot.lane.b32.xlu0 %v284, 110
        %v316 = vpop.permute.xlu0 %315
        %317 = vrot.lane.b32.xlu0 %v285, 110
        %v318 = vpop.permute.xlu0 %317
        %vm319 = vcmask 900096
        %v320 = vsel %vm319, %v314, %v316
        %v321 = vsel %vm319, %v316, %v318
        %325 = vrot.lane.b32.xlu0 %v283, 109
        %v326 = vpop.permute.xlu0 %325
        %327 = vrot.lane.b32.xlu0 %v284, 109
        %v328 = vpop.permute.xlu0 %327
        %329 = vrot.lane.b32.xlu0 %v285, 109
        %v330 = vpop.permute.xlu0 %329
        %vm331 = vcmask 891904
        %v332 = vsel %vm331, %v326, %v328
        %v333 = vsel %vm331, %v328, %v330
        %337 = vrot.lane.b32.xlu0 %v283, 108
        %v338 = vpop.permute.xlu0 %337
        %339 = vrot.lane.b32.xlu0 %v284, 108
        %v340 = vpop.permute.xlu0 %339
        %341 = vrot.lane.b32.xlu0 %v285, 108
        %v342 = vpop.permute.xlu0 %341
        %vm343 = vcmask 883712
        %v344 = vsel %vm343, %v338, %v340
        %v345 = vsel %vm343, %v340, %v342
        %349 = vrot.lane.b32.xlu0 %v283, 92
        %v350 = vpop.permute.xlu0 %349
        %351 = vrot.lane.b32.xlu0 %v284, 92
        %v352 = vpop.permute.xlu0 %351
        %353 = vrot.lane.b32.xlu0 %v285, 92
        %v354 = vpop.permute.xlu0 %353
        %vm355 = vcmask 752640
        %v356 = vsel %vm355, %v350, %v352
        %v357 = vsel %vm355, %v352, %v354
        %361 = vrot.lane.b32.xlu0 %v283, 91
        %v362 = vpop.permute.xlu0 %361
        %363 = vrot.lane.b32.xlu0 %v284, 91
        %v364 = vpop.permute.xlu0 %363
        %365 = vrot.lane.b32.xlu0 %v285, 91
        %v366 = vpop.permute.xlu0 %365
        %vm367 = vcmask 744448
        %v368 = vsel %vm367, %v362, %v364
        %v369 = vsel %vm367, %v364, %v366
        %373 = vrot.lane.b32.xlu0 %v283, 90
        %v374 = vpop.permute.xlu0 %373
        %375 = vrot.lane.b32.xlu0 %v284, 90
        %v376 = vpop.permute.xlu0 %375
        %377 = vrot.lane.b32.xlu0 %v285, 90
        %v378 = vpop.permute.xlu0 %377
        %vm379 = vcmask 736256
        %v380 = vsel %vm379, %v374, %v376
        %v381 = vsel %vm379, %v376, %v378
        %v385 = vld [vmem:[%s1] sm:$0xff]
        %v386 = vld [vmem:[%s2] sm:$0xff]
        %388 = vset.pattern.permute.xlu0 0
        %389 = vperm.xlu0 %388, %v386
        %v390 = vpop.permute.xlu0 %389
        %vm392 = vcmask 588800
        %v394 = vsel %vm392, %v385, 0
        %396 = vmatprep.subr.mxu0 0.0
        %397 = vmatpush1.msra.mxu0 0.0
        %398 = vmatprep.subr.mxu0 0.0
        %399 = vmatpush1.msra.mxu0 0.0
        %400 = vmatprep.subr.mxu0 0.0
        %401 = vmatpush1.msra.mxu0 0.0
        %402 = vmatprep.subr.mxu0 0.0
        %403 = vmatpush1.msra.mxu0 0.0
        %404 = vmatprep.subr.mxu0 0.0
        %405 = vmatpush1.msra.mxu0 0.0
        %406 = vmatprep.subr.mxu0 0.0
        %407 = vmatpush1.msra.mxu0 0.0
        %408 = vmatprep.subr.mxu0 0.0
        %409 = vmatpush1.msra.mxu0 0.0
        %410 = vmatprep.subr.mxu0 %v381
        %411 = vmatpush1.msra.mxu0 %v380
        %412 = vmatprep.subr.mxu0 %v369
        %413 = vmatpush1.msra.mxu0 %v368
        %414 = vmatprep.subr.mxu0 %v357
        %415 = vmatpush1.msra.mxu0 %v356
        %416 = vmatprep.subr.mxu0 %v345
        %417 = vmatpush1.msra.mxu0 %v344
        %418 = vmatprep.subr.mxu0 %v333
        %419 = vmatpush1.msra.mxu0 %v332
        %420 = vmatprep.subr.mxu0 %v321
        %421 = vmatpush1.msra.mxu0 %v320
        %422 = vmatprep.subr.mxu0 %v309
        %423 = vmatpush1.msra.mxu0 %v308
        %424 = vmatprep.subr.mxu0 %v297
        %425 = vmatpush1.msra.mxu0 %v296
        %426 = vmatprep.subr.mxu0 %v284
        %427 = vmatpush1.msra.mxu0 %v283
        %428 = vmatprep.subr.mxu0 0.0
        %429 = vmatpush2.msra.mxu0 0.0
        %430 = vmatprep.subr.mxu0 0.0
        %431 = vmatpush2.msra.mxu0 0.0
        %432 = vmatprep.subr.mxu0 0.0
        %433 = vmatpush2.msra.mxu0 0.0
        %434 = vmatprep.subr.mxu0 0.0
        %435 = vmatpush2.msra.mxu0 0.0
        %436 = vmatprep.subr.mxu0 0.0
        %437 = vmatpush2.msra.mxu0 0.0
        %438 = vmatprep.subr.mxu0 0.0
        %439 = vmatpush2.msra.mxu0 0.0
        %440 = vmatprep.subr.mxu0 0.0
        %441 = vmatpush2.msra.mxu0 0.0
        %442 = vmatprep.subr.mxu0 0.0
        %443 = vmatpush2.msra.mxu0 0.0
        %444 = vmatprep.subr.mxu0 0.0
        %445 = vmatpush2.msra.mxu0 0.0
        %446 = vmatprep.subr.mxu0 0.0
        %447 = vmatpush2.msra.mxu0 0.0
        %448 = vmatprep.subr.mxu0 0.0
        %449 = vmatpush2.msra.mxu0 0.0
        %450 = vmatprep.subr.mxu0 0.0
        %451 = vmatpush2.msra.mxu0 0.0
        %452 = vmatprep.subr.mxu0 0.0
        %453 = vmatpush2.msra.mxu0 0.0
        %454 = vmatprep.subr.mxu0 0.0
        %455 = vmatpush2.msra.mxu0 0.0
        %456 = vmatprep.subr.mxu0 0.0
        %457 = vmatpush2.msra.mxu0 0.0
        %458 = vmatprep.subr.mxu0 0.0
        %459 = vmatpush2.msra.mxu0 0.0
        %460 = vmatprep.mubr.f32.mxu0 0.0
        %461 = vmatmul.mubr.f32.gmra.mxu0 %v394
        %v462 = vpop.f32.mrf.mxu0
        %v463 = vadd.f32 %v390, %v462
        %v464 = vpop.f32.mrf.mxu0
        %v465 = vadd.f32 %v390, %v464
        %466 = vdwg.mxu0
        %467 = vmatprep.subr.mxu0 0.0
        %468 = vmatpush1.msra.mxu0 0.0
        %469 = vmatprep.subr.mxu0 0.0
        %470 = vmatpush1.msra.mxu0 0.0
        %471 = vmatprep.subr.mxu0 0.0
        %472 = vmatpush1.msra.mxu0 0.0
        %473 = vmatprep.subr.mxu0 0.0
        %474 = vmatpush1.msra.mxu0 0.0
        %475 = vmatprep.subr.mxu0 0.0
        %476 = vmatpush1.msra.mxu0 0.0
        %477 = vmatprep.subr.mxu0 0.0
        %478 = vmatpush1.msra.mxu0 0.0
        %479 = vmatprep.subr.mxu0 0.0
        %480 = vmatpush1.msra.mxu0 0.0
        %481 = vmatprep.subr.mxu0 0.0
        %482 = vmatpush1.msra.mxu0 %v378
        %483 = vmatprep.subr.mxu0 0.0
        %484 = vmatpush1.msra.mxu0 %v366
        %485 = vmatprep.subr.mxu0 0.0
        %486 = vmatpush1.msra.mxu0 %v354
        %487 = vmatprep.subr.mxu0 0.0
        %488 = vmatpush1.msra.mxu0 %v342
        %489 = vmatprep.subr.mxu0 0.0
        %490 = vmatpush1.msra.mxu0 %v330
        %491 = vmatprep.subr.mxu0 0.0
        %492 = vmatpush1.msra.mxu0 %v318
        %493 = vmatprep.subr.mxu0 0.0
        %494 = vmatpush1.msra.mxu0 %v306
        %495 = vmatprep.subr.mxu0 0.0
        %496 = vmatpush1.msra.mxu0 %v294
        %497 = vmatprep.subr.mxu0 0.0
        %498 = vmatpush1.msra.mxu0 %v285
        %499 = vmatprep.subr.mxu0 0.0
        %500 = vmatpush2.msra.mxu0 0.0
        %501 = vmatprep.subr.mxu0 0.0
        %502 = vmatpush2.msra.mxu0 0.0
        %503 = vmatprep.subr.mxu0 0.0
        %504 = vmatpush2.msra.mxu0 0.0
        %505 = vmatprep.subr.mxu0 0.0
        %506 = vmatpush2.msra.mxu0 0.0
        %507 = vmatprep.subr.mxu0 0.0
        %508 = vmatpush2.msra.mxu0 0.0
        %509 = vmatprep.subr.mxu0 0.0
        %510 = vmatpush2.msra.mxu0 0.0
        %511 = vmatprep.subr.mxu0 0.0
        %512 = vmatpush2.msra.mxu0 0.0
        %513 = vmatprep.subr.mxu0 0.0
        %514 = vmatpush2.msra.mxu0 0.0
        %515 = vmatprep.subr.mxu0 0.0
        %516 = vmatpush2.msra.mxu0 0.0
        %517 = vmatprep.subr.mxu0 0.0
        %518 = vmatpush2.msra.mxu0 0.0
        %519 = vmatprep.subr.mxu0 0.0
        %520 = vmatpush2.msra.mxu0 0.0
        %521 = vmatprep.subr.mxu0 0.0
        %522 = vmatpush2.msra.mxu0 0.0
        %523 = vmatprep.subr.mxu0 0.0
        %524 = vmatpush2.msra.mxu0 0.0
        %525 = vmatprep.subr.mxu0 0.0
        %526 = vmatpush2.msra.mxu0 0.0
        %527 = vmatprep.subr.mxu0 0.0
        %528 = vmatpush2.msra.mxu0 0.0
        %529 = vmatprep.subr.mxu0 0.0
        %530 = vmatpush2.msra.mxu0 0.0
        %531 = vmatprep.mubr.f32.mxu0 0.0
        %532 = vmatmul.mubr.f32.gmra.mxu0 %v394
        %v533 = vpop.f32.mrf.mxu0
        %v534 = vadd.f32 %v390, %v533
        %v535 = vpop.f32.mrf.mxu0
        %536 = vdwg.mxu0
        %v537 = vmax.f32 %v463, 0.0
        %v538 = vmax.f32 %v465, 0.0
        %v539 = vmax.f32 %v534, 0.0
        %v540 = vld [vmem:[#allocation7] sm:$0x7]
        %v542 = vlaneseq
        %v543 = vshrl.u32 %v542, 7
        %v544 = vsub.s32 0, %v543
        %v545 = vrot.slane %v540, %v544
        %v546 = vlaneseq
        %v547 = vshrl.u32 %v546, 7
        %v548 = vsub.s32 1, %v547
        %v549 = vrot.slane %v540, %v548
        %v550 = vlaneseq
        %v551 = vshrl.u32 %v550, 7
        %v552 = vsub.s32 2, %v551
        %v553 = vrot.slane %v540, %v552
        %v557 = vmul.f32 %v537, %v545
        %v558 = vmul.f32 %v538, %v549
        %v559 = vmul.f32 %v539, %v553
        %vm560 = vcmask 154624
        %561 = vst.msk [vmem:[#allocation2] sm:$0xff] %vm560, 0.0
        %vm562 = vcmask 572824
        %563 = vst.msk [vmem:[#allocation2 + $0x10] sm:$0xff] %vm562, 0.0
        %567 = vrot.lane.b32.xlu0 %v557, 19
        %v568 = vpop.permute.xlu0 %567
        %569 = vrot.lane.b32.xlu0 %v558, 19
        %v570 = vpop.permute.xlu0 %569
        %571 = vrot.lane.b32.xlu0 %v559, 19
        %v572 = vpop.permute.xlu0 %571
        %v573 = vsel %vm560, %v568, %v570
        %v574 = vsel %vm560, %v570, %v572
        %vm578 = vcmask 1047704
        %579 = vst.msk [vmem:[#allocation2] sm:$0xff] %vm578, %v568
        %580 = vst [vmem:[#allocation2 + $0x8] sm:$0xff] %v573
        %vm581 = vcmask 416768
        %582 = vst.msk [vmem:[#allocation2 + $0x10] sm:$0xff] %vm581, %v574
        %v583 = vld [vmem:[%s3] sm:$0xff]
        %v584 = vld [vmem:[#allocation2] sm:$0xff]
        %v585 = vld [vmem:[#allocation2 + $0x8] sm:$0xff]
        %v586 = vld [vmem:[#allocation2 + $0x10] sm:$0xff]
        %588 = vset.pattern.permute.xlu0 0
        %589 = vperm.xlu0 %588, %v583
        %v590 = vpop.permute.xlu0 %589
        %v592 = vmul.f32 %v584, %v590
        %v593 = vmul.f32 %v585, %v590
        %v594 = vmul.f32 %v586, %v590
        %v595 = vadd.f32 %v592, 0.0
        %v596 = vadd.f32 %v593, 0.0
        %v597 = vadd.f32 %v594, 0.0
        %598 = vset.pattern.permute.xlu0 1
        %599 = vperm.xlu0 %598, %v583
        %v600 = vpop.permute.xlu0 %599
        %v602 = vmul.f32 %v584, %v600
        %v603 = vmul.f32 %v585, %v600
        %v604 = vmul.f32 %v586, %v600
        %608 = vrot.lane.b32.xlu0 %v602, 127
        %v609 = vpop.permute.xlu0 %608
        %610 = vrot.lane.b32.xlu0 %v603, 127
        %v611 = vpop.permute.xlu0 %610
        %612 = vrot.lane.b32.xlu0 %v604, 127
        %v613 = vpop.permute.xlu0 %612
        %v614 = vsel %vm295, %v609, %v611
        %v615 = vsel %vm295, %v611, %v613
        %v619 = vadd.f32 %v595, %v614
        %v620 = vadd.f32 %v596, %v615
        %v621 = vadd.f32 %v597, %v613
        %622 = vset.pattern.permute.xlu0 2
        %623 = vperm.xlu0 %622, %v583
        %v624 = vpop.permute.xlu0 %623
        %v626 = vmul.f32 %v584, %v624
        %v627 = vmul.f32 %v585, %v624
        %v628 = vmul.f32 %v586, %v624
        %632 = vrot.lane.b32.xlu0 %v626, 126
        %v633 = vpop.permute.xlu0 %632
        %634 = vrot.lane.b32.xlu0 %v627, 126
        %v635 = vpop.permute.xlu0 %634
        %636 = vrot.lane.b32.xlu0 %v628, 126
        %v637 = vpop.permute.xlu0 %636
        %v638 = vsel %vm307, %v633, %v635
        %v639 = vsel %vm307, %v635, %v637
        %v643 = vadd.f32 %v619, %v638
        %v644 = vadd.f32 %v620, %v639
        %v645 = vadd.f32 %v621, %v637
        %646 = vset.pattern.permute.xlu0 3
        %647 = vperm.xlu0 %646, %v583
        %v648 = vpop.permute.xlu0 %647
        %v650 = vmul.f32 %v584, %v648
        %v651 = vmul.f32 %v585, %v648
        %v652 = vmul.f32 %v586, %v648
        %656 = vrot.lane.b32.xlu0 %v650, 110
        %v657 = vpop.permute.xlu0 %656
        %658 = vrot.lane.b32.xlu0 %v651, 110
        %v659 = vpop.permute.xlu0 %658
        %660 = vrot.lane.b32.xlu0 %v652, 110
        %v661 = vpop.permute.xlu0 %660
        %v662 = vsel %vm319, %v657, %v659
        %v663 = vsel %vm319, %v659, %v661
        %v667 = vadd.f32 %v643, %v662
        %v668 = vadd.f32 %v644, %v663
        %v669 = vadd.f32 %v645, %v661
        %670 = vset.pattern.permute.xlu0 4
        %671 = vperm.xlu0 %670, %v583
        %v672 = vpop.permute.xlu0 %671
        %v674 = vmul.f32 %v584, %v672
        %v675 = vmul.f32 %v585, %v672
        %v676 = vmul.f32 %v586, %v672
        %680 = vrot.lane.b32.xlu0 %v674, 109
        %v681 = vpop.permute.xlu0 %680
        %682 = vrot.lane.b32.xlu0 %v675, 109
        %v683 = vpop.permute.xlu0 %682
        %684 = vrot.lane.b32.xlu0 %v676, 109
        %v685 = vpop.permute.xlu0 %684
        %v686 = vsel %vm331, %v681, %v683
        %v687 = vsel %vm331, %v683, %v685
        %v691 = vadd.f32 %v667, %v686
        %v692 = vadd.f32 %v668, %v687
        %v693 = vadd.f32 %v669, %v685
        %694 = vset.pattern.permute.xlu0 5
        %695 = vperm.xlu0 %694, %v583
        %v696 = vpop.permute.xlu0 %695
        %v698 = vmul.f32 %v584, %v696
        %v699 = vmul.f32 %v585, %v696
        %v700 = vmul.f32 %v586, %v696
        %704 = vrot.lane.b32.xlu0 %v698, 108
        %v705 = vpop.permute.xlu0 %704
        %706 = vrot.lane.b32.xlu0 %v699, 108
        %v707 = vpop.permute.xlu0 %706
        %708 = vrot.lane.b32.xlu0 %v700, 108
        %v709 = vpop.permute.xlu0 %708
        %v710 = vsel %vm343, %v705, %v707
        %v711 = vsel %vm343, %v707, %v709
        %v715 = vadd.f32 %v691, %v710
        %v716 = vadd.f32 %v692, %v711
        %v717 = vadd.f32 %v693, %v709
        %718 = vset.pattern.permute.xlu0 6
        %719 = vperm.xlu0 %718, %v583
        %v720 = vpop.permute.xlu0 %719
        %v722 = vmul.f32 %v584, %v720
        %v723 = vmul.f32 %v585, %v720
        %v724 = vmul.f32 %v586, %v720
        %728 = vrot.lane.b32.xlu0 %v722, 92
        %v729 = vpop.permute.xlu0 %728
        %730 = vrot.lane.b32.xlu0 %v723, 92
        %v731 = vpop.permute.xlu0 %730
        %732 = vrot.lane.b32.xlu0 %v724, 92
        %v733 = vpop.permute.xlu0 %732
        %v734 = vsel %vm355, %v729, %v731
        %v735 = vsel %vm355, %v731, %v733
        %v739 = vadd.f32 %v715, %v734
        %v740 = vadd.f32 %v716, %v735
        %v741 = vadd.f32 %v717, %v733
        %742 = vset.pattern.permute.xlu0 7
        %743 = vperm.xlu0 %742, %v583
        %v744 = vpop.permute.xlu0 %743
        %v746 = vmul.f32 %v584, %v744
        %v747 = vmul.f32 %v585, %v744
        %v748 = vmul.f32 %v586, %v744
        %752 = vrot.lane.b32.xlu0 %v746, 91
        %v753 = vpop.permute.xlu0 %752
        %754 = vrot.lane.b32.xlu0 %v747, 91
        %v755 = vpop.permute.xlu0 %754
        %756 = vrot.lane.b32.xlu0 %v748, 91
        %v757 = vpop.permute.xlu0 %756
        %v758 = vsel %vm367, %v753, %v755
        %v759 = vsel %vm367, %v755, %v757
        %v763 = vadd.f32 %v739, %v758
        %v764 = vadd.f32 %v740, %v759
        %v765 = vadd.f32 %v741, %v757
        %766 = vset.pattern.permute.xlu0 8
        %767 = vperm.xlu0 %766, %v583
        %v768 = vpop.permute.xlu0 %767
        %v770 = vmul.f32 %v584, %v768
        %v771 = vmul.f32 %v585, %v768
        %v772 = vmul.f32 %v586, %v768
        %776 = vrot.lane.b32.xlu0 %v770, 90
        %v777 = vpop.permute.xlu0 %776
        %778 = vrot.lane.b32.xlu0 %v771, 90
        %v779 = vpop.permute.xlu0 %778
        %780 = vrot.lane.b32.xlu0 %v772, 90
        %v781 = vpop.permute.xlu0 %780
        %v782 = vsel %vm379, %v777, %v779
        %v783 = vsel %vm379, %v779, %v781
        %v787 = vadd.f32 %v763, %v782
        %v788 = vadd.f32 %v764, %v783
        %v789 = vadd.f32 %v765, %v781
        %v790 = vrot.slane %v787, 4
        %v791 = vadd.f32 %v787, %v790
        %v792 = vrot.slane %v791, 2
        %v793 = vadd.f32 %v791, %v792
        %v794 = vrot.slane %v793, 1
        %v795 = vadd.f32 %v793, %v794
        %v796 = vrot.slane %v788, 4
        %v797 = vadd.f32 %v788, %v796
        %v798 = vrot.slane %v797, 2
        %v799 = vadd.f32 %v797, %v798
        %v800 = vrot.slane %v799, 1
        %v801 = vadd.f32 %v799, %v800
        %vm802 = vcmask 261120
        %v803 = vsel %vm802, %v789, 0.0
        %v804 = vrot.slane %v803, 4
        %v805 = vadd.f32 %v803, %v804
        %v806 = vrot.slane %v805, 2
        %v807 = vadd.f32 %v805, %v806
        %v808 = vrot.slane %v807, 1
        %v809 = vadd.f32 %v807, %v808
        %v810 = vld [vmem:[#allocation3] sm:$0x1]
        %812 = vset.pattern.permute.xlu0 0
        %813 = vperm.xlu0 %812, %v810
        %v814 = vpop.permute.xlu0 %813
        %v816 = vlaneseq
        %v817 = vshrl.u32 %v816, 7
        %v818 = vsub.s32 0, %v817
        %v819 = vrot.slane %v814, %v818
        %v820 = vadd.f32 %v795, %v819
        %v821 = vadd.f32 %v801, %v819
        %v822 = vadd.f32 %v809, %v819
        %v823 = vmax.f32 %v820, 0.0
        %v824 = vmax.f32 %v821, 0.0
        %v825 = vmax.f32 %v822, 0.0
        %v826 = vld [vmem:[%s250] sm:$0xf0]
        %v827 = vld [vmem:[%s250 + $0x8] sm:$0xf0]
        %v828 = vld [vmem:[%s250 + $0x10] sm:$0xf0]
        %832 = vrot.lane.b32.xlu0 %v823, 19
        %v833 = vpop.permute.xlu0 %832
        %834 = vrot.lane.b32.xlu0 %v824, 19
        %v835 = vpop.permute.xlu0 %834
        %836 = vrot.lane.b32.xlu0 %v825, 19
        %v837 = vpop.permute.xlu0 %836
        %v838 = vsel %vm560, %v833, %v835
        %v839 = vsel %vm560, %v835, %v837
        %v843 = vmul.f32 %v826, %v833
        %v844 = vmul.f32 %v827, %v838
        %v845 = vmul.f32 %v828, %v839
        %v849 = vcombine.high %v843, %v844
        %v850 = vcombine.high %v845, %v845
        %851 = vrot.lane.b32.xlu0 %v849, 109
        %v852 = vpop.permute.xlu0 %851
        %853 = vrot.lane.b32.xlu0 %v850, 109
        %v854 = vpop.permute.xlu0 %853
        %v855 = vrot.slane %v852, 4
        %v856 = vrot.slane %v854, 4
        %vm857 = vcmask 1043456
        %v858 = vsel %vm857, %v855, %v856
        %v859 = vsel %vm331, %v852, %v858
        %862 = vst [vmem:[%s282] sm:$0xff] %v859
        %vm863 = vcmask 257024
        %864 = vst.msk [vmem:[%s282 + $0x8] sm:$0xf] %vm863, %v854
        %s865 = sand.u32 %s165, 1
        %s866 = scalar_lea.sflag [#allocation6], %s865
        %s867 = sand.u32 %s165, 1
        %s868 = smul.addr %s867, 12
        %s869 = scalar_lea.vmem [#allocation9], %s868
        // Predicated region
        $region53: #{tpu_custom_call.1} parent=43 // pred_check
          %p870 = pneg %p175
        $region54: #{tpu_custom_call.1} parent=43 // pred_check_branch
          %872 = sbr.rel (%p870) target = $region56
        $region55: #{tpu_custom_call.1} parent=43 // pred_region
          %s874 = ssub.s32 192, 192
          %875 = vsyncadd %s866, %s874
          %s876 = smul.addr %s26, 3
          %s877 = smul.addr %s876, 64
          %s878 = scalar_lea.hbm %s6, %s877
          %s880 = sshll.u32 %s869, 4
          %s881 = int_to_ptr.vmem [resolvable:$true] %s880
          %883 = dma.vmem_to_hbm [thread:$0]  %s881, 192, %s878, %s866
        $region56: #{tpu_custom_call.1} parent=43 // pred_fallthru
          _
      $region44: #{tpu_custom_call.1} parent=5 // pred_fallthru
        _
      %p884 = scmp.le.s32.totalorder 2, %s21
      // Predicated region
      $region57: #{tpu_custom_call.1} parent=5 // pred_check
        %p885 = pneg %p884
      $region58: #{tpu_custom_call.1} parent=5 // pred_check_branch
        %887 = sbr.rel (%p885) target = $region60
      $region59: #{tpu_custom_call.1} parent=5 // pred_region
        %s888 = ssub.s32 %s21, 2
        // Predicated region
        $region61: #{tpu_custom_call.1} parent=59 // pred_check
          %p889 = pneg %p181
        $region62: #{tpu_custom_call.1} parent=59 // pred_check_branch
          %891 = sbr.rel (%p889) target = $region64
        $region63: #{tpu_custom_call.1} parent=59 // pred_region
          %s892 = sand.u32 %s166, 1
          %s893 = scalar_lea.sflag [#allocation6], %s892
          %s894 = sand.u32 %s166, 1
          %s895 = smul.addr %s894, 12
          %s896 = scalar_lea.vmem [#allocation9], %s895
          %897 = dma.done %s893, 192
        $region64: #{tpu_custom_call.1} parent=59 // pred_fallthru
          _
      $region60: #{tpu_custom_call.1} parent=5 // pred_fallthru
        _
    $region6: #{tpu_custom_call.1} parent=1 // loop_footer
      %s25 = sadd.s32 1, %s21
    $region7: #{tpu_custom_call.1} parent=1 // loop_footer_branch
      %20 = sbr.rel target = $region3
    $region8: #{tpu_custom_call.1} parent=1 // loop_exit
      _
    %898 = vsyncpa [#allocation5], 1
    %s899 = scalar_lea.sflag [#allocation5], 1
    %900 = vsyncpa %s899, 1
    %901 = vsyncpa [#allocation8], 1
    %902 = vsyncpa [#allocation6], 1
    %s903 = scalar_lea.sflag [#allocation6], 1
    %904 = vsyncpa %s903, 1

</llo_original>
